<compile_context>
chip_gen: v7x
topology: tpu7x:2x2x1
jax: 0.10.0
libtpu: 0.0.40
codegen_flags: <defaults>
</compile_context>

<pallas_src>
import math

import jax
import jax.numpy as jnp
from jax.experimental import pallas as pl
from jax.experimental.pallas import tpu as pltpu

_LANES = 128
_SUBLANES = 8
_TM_MAX = 2048  # folded rows per grid step


def _round_up(v, m):
    return ((v + m - 1) // m) * m


def _linear_kernel(x_ref, wt_ref, b_ref, o_ref):
    # x_ref:  [TM, fold*K]           (streamed per grid step)
    # wt_ref: [fold*K, fold*N]       (block-diagonal W^T, resident)
    # b_ref:  [1, fold*N]            (tiled bias, resident)
    # o_ref:  [TM, fold*N]           (lane-dense output block)
    acc = jnp.dot(x_ref[...], wt_ref[...], preferred_element_type=jnp.float32)
    o_ref[...] = (acc + b_ref[...].astype(jnp.float32)).astype(o_ref.dtype)


@jax.jit
def spatial_embedding(x, weight, bias):
    """Equivalent of nn.Linear(5, embed_dim) forward.

    x:      [..., 5]
    weight: [embed_dim, 5]   (PyTorch convention)
    bias:   [embed_dim]
    returns [..., embed_dim]
    """
    in_features = weight.shape[1]
    embed_dim = weight.shape[0]
    lead_shape = x.shape[:-1]
    m = math.prod(lead_shape) if lead_shape else 1

    # Fold rows so the output last dim is a multiple of 128 lanes.
    if embed_dim < _LANES and _LANES % embed_dim == 0:
        fold = _LANES // embed_dim
    else:
        fold = 1
    kf = fold * in_features
    nf = fold * embed_dim

    # Choose tile size and pad folded row count to a multiple of it.
    folded_m = pl.cdiv(m, fold)
    tm = min(_TM_MAX, _round_up(folded_m, _SUBLANES))
    folded_m_pad = _round_up(folded_m, tm)
    m_pad = folded_m_pad * fold

    x2d = x.reshape(m, in_features)
    if m_pad != m:
        x2d = jnp.pad(x2d, ((0, m_pad - m), (0, 0)))
    # Pure row-major reshape: folded row r = [x[F*r], ..., x[F*r + F-1]].
    x_folded = x2d.reshape(folded_m_pad, kf)

    wt = weight.T.astype(x.dtype)  # [K, N]
    if fold > 1:
        # Block-diagonal W^T: fold copies of [K, N] on the diagonal -> [fold*K, fold*N].
        wt = jnp.kron(jnp.eye(fold, dtype=wt.dtype), wt)
        b2d = jnp.tile(bias.astype(x.dtype), fold).reshape(1, nf)
    else:
        b2d = bias.astype(x.dtype).reshape(1, nf)

    itemsize = jnp.dtype(x.dtype).itemsize
    cost = pl.CostEstimate(
        flops=2 * m_pad * in_features * embed_dim,
        transcendentals=0,
        bytes_accessed=(x_folded.size + wt.size + b2d.size + folded_m_pad * nf)
        * itemsize,
    )

    out = pl.pallas_call(
        _linear_kernel,
        out_shape=jax.ShapeDtypeStruct((folded_m_pad, nf), x.dtype),
        grid_spec=pltpu.PrefetchScalarGridSpec(
            num_scalar_prefetch=0,
            grid=(folded_m_pad // tm,),
            in_specs=[
                pl.BlockSpec((tm, kf), lambda i: (i, 0)),   # x streams over M
                pl.BlockSpec((kf, nf), lambda i: (0, 0)),   # W^T resident
                pl.BlockSpec((1, nf), lambda i: (0, 0)),    # bias resident
            ],
            out_specs=pl.BlockSpec((tm, nf), lambda i: (i, 0)),
        ),
        compiler_params=pltpu.CompilerParams(
            dimension_semantics=("parallel",),  # shards over 2 TCs on v7x
        ),
        cost_estimate=cost,
    )(x_folded, wt, b2d)

    # Unfold (pure reshape, same row-major layout), drop padded rows.
    out = out.reshape(m_pad, embed_dim)[:m]
    return out.reshape(*lead_shape, embed_dim)


if __name__ == "__main__":
    # args.encoder_embed_dim = 32; input positional features have size 5.
    batch, seq, in_features, embed_dim = 2, 8, 5, 32

    key = jax.random.PRNGKey(0)
    k_x, k_w, k_b = jax.random.split(key, 3)

    x = jax.random.normal(k_x, (batch, seq, in_features), dtype=jnp.float32)
    # Deterministic parameter init (synthetic; mimics nn.Linear shapes).
    weight = jax.random.normal(k_w, (embed_dim, in_features), dtype=jnp.float32) * 0.1
    bias = jax.random.normal(k_b, (embed_dim,), dtype=jnp.float32) * 0.01

    out = spatial_embedding(x, weight, bias)
    out = jax.block_until_ready(out)

    # Reference check against plain JAX linear.
    ref = x @ weight.T + bias
    assert out.shape == (batch, seq, embed_dim)
    assert jnp.allclose(out, ref, atol=1e-5, rtol=1e-5)

    print("KERNEL_OK")
</pallas_src>

<mosaic_0001>
module attributes {stable_mosaic.version = 11 : i64} {
  func.func @_linear_kernel(%arg0: i32, %arg1: memref<8x20xf32, #tpu.memory_space<vmem>>, %arg2: memref<20x128xf32, #tpu.memory_space<vmem>>, %arg3: memref<1x128xf32, #tpu.memory_space<vmem>>, %arg4: memref<8x128xf32, #tpu.memory_space<vmem>>) attributes {dimension_semantics = [#tpu.dimension_semantics<parallel>], iteration_bounds = array<i64: 1>, scalar_prefetch = 0 : i64, scratch_operands = 0 : i64, tpu.core_type = #tpu.core_type<tc>, window_params = [{transform_indices = @transform_0, window_bounds = array<i64: 8, 20>}, {pipeline_mode = #tpu.pipeline_mode<synchronous>, transform_indices = @transform_1, window_bounds = array<i64: 20, 128>}, {pipeline_mode = #tpu.pipeline_mode<synchronous>, transform_indices = @transform_2, window_bounds = array<i64: 1, 128>}, {transform_indices = @transform_3, window_bounds = array<i64: 8, 128>}]} {
    %c0 = arith.constant 0 : index
    %c0_0 = arith.constant 0 : index
    %0 = vector.load %arg1[%c0, %c0_0] : memref<8x20xf32, #tpu.memory_space<vmem>>, vector<8x20xf32>
    %c0_1 = arith.constant 0 : index
    %c0_2 = arith.constant 0 : index
    %1 = vector.load %arg2[%c0_1, %c0_2] : memref<20x128xf32, #tpu.memory_space<vmem>>, vector<20x128xf32>
    %cst = arith.constant dense<0.000000e+00> : vector<8x128xf32>
    %2 = tpu.matmul %0, %1, %cst {dimension_numbers = #tpu.dot_dimension_numbers<[1], [0], [0], [1], [0, 0, 1, 1], [], []>} : vector<8x20xf32>, vector<20x128xf32>, vector<8x128xf32> -> vector<8x128xf32>
    %c0_3 = arith.constant 0 : index
    %c0_4 = arith.constant 0 : index
    %3 = vector.load %arg3[%c0_3, %c0_4] : memref<1x128xf32, #tpu.memory_space<vmem>>, vector<1x128xf32>
    %4 = vector.broadcast %3 : vector<1x128xf32> to vector<8x128xf32>
    %5 = arith.addf %2, %4 : vector<8x128xf32>
    %c0_5 = arith.constant 0 : index
    %c0_6 = arith.constant 0 : index
    %6 = vector.load %arg4[%c0_5, %c0_6] : memref<8x128xf32, #tpu.memory_space<vmem>>, vector<8x128xf32>
    tpu.vector_store %arg4[%c0_5, %c0_6], %5 {strides = array<i32>} : memref<8x128xf32, #tpu.memory_space<vmem>>, vector<8x128xf32>,
    return
  }
  func.func @transform_0(%arg0: i32) -> (i32, i32) {
    %c0_i32 = arith.constant 0 : i32
    %c0_i32_0 = arith.constant 0 : i32
    return %arg0, %c0_i32 : i32, i32
  }
  func.func @transform_1(%arg0: i32) -> (i32, i32) {
    %c0_i32 = arith.constant 0 : i32
    %c0_i32_0 = arith.constant 0 : i32
    %c0_i32_1 = arith.constant 0 : i32
    return %c0_i32, %c0_i32_0 : i32, i32
  }
  func.func @transform_2(%arg0: i32) -> (i32, i32) {
    %c0_i32 = arith.constant 0 : i32
    %c0_i32_0 = arith.constant 0 : i32
    %c0_i32_1 = arith.constant 0 : i32
    return %c0_i32, %c0_i32_0 : i32, i32
  }
  func.func @transform_3(%arg0: i32) -> (i32, i32) {
    %c0_i32 = arith.constant 0 : i32
    %c0_i32_0 = arith.constant 0 : i32
    return %arg0, %c0_i32 : i32, i32
  }
}

</mosaic_0001>

<llo_original>
// kernel: tile.8
$region0: #{tile.8}
  #allocation0 [shape = 's32[1]{0}', space=sflag, size = 0x4, scoped, tag = 'scoped memory for tile.8']
  %s0 = inlined_call_operand.vmem [shape: f32[32], index: 0, kind: input, shape index: {}]
  %s1 = inlined_call_operand.vmem [shape: f32[4,32], index: 1, kind: output, shape index: {}]
  // Predicated region
  $region2: #{tile.8} parent=0 // pred_check
    _
  $region3: #{tile.8} parent=0 // pred_check_branch
    %3 = sbr.rel (0) target = $region5
  $region4: #{tile.8} parent=0 // pred_region
    _
  $region5: #{tile.8} parent=0 // pred_fallthru
    _
  %v4 = vld [vmem:[%s0] ss:$0 sm:$0xff]
  %5 = vst [vmem:[%s1] sm:$0xf] %v4

// kernel: tile.9
$region0: #{tile.9}
  %s0 = inlined_call_operand.vmem [shape: f32[4,32], index: 0, kind: input, shape index: {}]
  %s1 = inlined_call_operand.vmem [shape: f32[1,128], index: 1, kind: output, shape index: {}]
  $region1: #{tile.9} parent=0
    #allocation0 [shape = 'u8[4096]{0}', space=vmem, size = 0x1000, scoped, tag = 'scoped mem for output reshape']
    #allocation1 [shape = 'u8[4096]{0}', space=vmem, size = 0x1000, scoped, tag = 'scoped mem for input reshape']
    %s3 = sshllo.u32 0, 4
    %v4 = vld [vmem:[%s0] sm:%s3]
    %5 = vst [vmem:[#allocation1] sm:%s3] %v4
    %v6 = vld [vmem:[#allocation1] sm:$0x1]
    %vm7 = vcmask 261120
    %8 = vst.msk [vmem:[#allocation0] sm:$0x1] %vm7, %v6
    %s9 = scalar_lea.vmem [#allocation1], 3
    %v10 = vld [vmem:[%s9] sm:$0x1]
    %11 = vrot.lane.b32.xlu0 %v10, 96
    %v12 = vpop.permute.xlu0 %11
    %vm13 = vcmask 1048320
    %14 = vst.msk [vmem:[#allocation0] sm:$0x1] %vm13, %v12
    %s15 = scalar_lea.vmem [#allocation1], 2
    %v16 = vld [vmem:[%s15] sm:$0x1]
    %17 = vrot.lane.b32.xlu0 %v16, 64
    %v18 = vpop.permute.xlu0 %17
    %vm19 = vcmask 785920
    %20 = vst.msk [vmem:[#allocation0] sm:$0x1] %vm19, %v18
    %s21 = scalar_lea.vmem [#allocation1], 1
    %v22 = vld [vmem:[%s21] sm:$0x1]
    %23 = vrot.lane.b32.xlu0 %v22, 32
    %v24 = vpop.permute.xlu0 %23
    %vm25 = vcmask 523520
    %26 = vst.msk [vmem:[#allocation0] sm:$0x1] %vm25, %v24
    %s28 = sshllo.u32 0, 1
    %v30 = vld [vmem:[#allocation0] sm:%s28]
    %s31 = sshllo.u32 0, 1
    %32 = vst [vmem:[%s1] sm:%s31] %v30

// kernel: spatial_embedding.1
$region0: #{spatial_embedding.1}
  #allocation0 [shape = 'u32[]', space=smem, size = 0x4, offset = 0x4, fixed_abs, tag = 'smem constant byte address 0x4 - core index']
  #allocation1 [shape = 'u32[144,128]{1,0:T(1,128)}', space=vmem, size = 0x12000, scoped, tag = 'internal scratch']
  %s0 = inlined_call_operand.vmem [shape: f32[8,20], index: 0, kind: input, shape index: {}]
  %s1 = inlined_call_operand.vmem [shape: f32[20,128], index: 1, kind: input, shape index: {}]
  %s2 = inlined_call_operand.vmem [shape: f32[1,128], index: 2, kind: input, shape index: {}]
  %s3 = inlined_call_operand.vmem [shape: f32[8,128], index: 3, kind: output, shape index: {}]
  %s4 = sld [smem:[#allocation0]]
  $region22: #{spatial_embedding.1} parent=0
    _
  %s6 = ssub.s32 1, %s4
  %s7 = scalar_select 0, %s6, %s4
  // Predicated region
  $region2: #{spatial_embedding.1} parent=0 // pred_check
    _
  $region3: #{spatial_embedding.1} parent=0 // pred_check_branch
    %9 = sbr.rel (0) target = $region5
  $region4: #{spatial_embedding.1} parent=0 // pred_region
    _
  $region5: #{spatial_embedding.1} parent=0 // pred_fallthru
    _
  // Predicated region
  $region6: #{spatial_embedding.1} parent=0 // pred_check
    _
  $region7: #{spatial_embedding.1} parent=0 // pred_check_branch
    %11 = sbr.rel (0) target = $region9
  $region8: #{spatial_embedding.1} parent=0 // pred_region
    _
  $region9: #{spatial_embedding.1} parent=0 // pred_fallthru
    _
  // Predicated region
  $region10: #{spatial_embedding.1} parent=0 // pred_check
    _
  $region11: #{spatial_embedding.1} parent=0 // pred_check_branch
    %13 = sbr.rel (0) target = $region13
  $region12: #{spatial_embedding.1} parent=0 // pred_region
    _
  $region13: #{spatial_embedding.1} parent=0 // pred_fallthru
    _
  %v14 = vld [vmem:[%s0] sm:$0xff]
  %v15 = vld [vmem:[%s1] sm:$0xff]
  %v16 = vld [vmem:[%s1 + $0x8] sm:$0xff]
  %v17 = vld [vmem:[%s1 + $0x10] sm:$0xf]
  %v18 = vld [vmem:[%s2] sm:$0x1]
  %v20 = vlaneseq
  %v21 = vshrl.u32 %v20, 7
  %v22 = vsub.s32 0, %v21
  %v23 = vrot.slane %v18, %v22
  %vm25 = vcmask 162816
  %v27 = vsel %vm25, %v14, 0
  %vm29 = vcmask 1043456
  %v31 = vsel %vm29, %v17, 0
  %33 = vmatprep.subr.mxu0 0.0
  %34 = vmatpush1.msra.mxu0 %v15
  %35 = vmatprep.subr.mxu0 0.0
  %36 = vmatpush1.msra.mxu0 %v16
  %37 = vmatprep.subr.mxu0 0.0
  %38 = vmatpush1.msra.mxu0 %v31
  %39 = vmatprep.subr.mxu0 0.0
  %40 = vmatpush1.msra.mxu0 0.0
  %41 = vmatprep.subr.mxu0 0.0
  %42 = vmatpush1.msra.mxu0 0.0
  %43 = vmatprep.subr.mxu0 0.0
  %44 = vmatpush1.msra.mxu0 0.0
  %45 = vmatprep.subr.mxu0 0.0
  %46 = vmatpush1.msra.mxu0 0.0
  %47 = vmatprep.subr.mxu0 0.0
  %48 = vmatpush1.msra.mxu0 0.0
  %49 = vmatprep.subr.mxu0 0.0
  %50 = vmatpush1.msra.mxu0 0.0
  %51 = vmatprep.subr.mxu0 0.0
  %52 = vmatpush1.msra.mxu0 0.0
  %53 = vmatprep.subr.mxu0 0.0
  %54 = vmatpush1.msra.mxu0 0.0
  %55 = vmatprep.subr.mxu0 0.0
  %56 = vmatpush1.msra.mxu0 0.0
  %57 = vmatprep.subr.mxu0 0.0
  %58 = vmatpush1.msra.mxu0 0.0
  %59 = vmatprep.subr.mxu0 0.0
  %60 = vmatpush1.msra.mxu0 0.0
  %61 = vmatprep.subr.mxu0 0.0
  %62 = vmatpush1.msra.mxu0 0.0
  %63 = vmatprep.subr.mxu0 0.0
  %64 = vmatpush1.msra.mxu0 0.0
  %65 = vmatprep.subr.mxu0 0.0
  %66 = vmatpush1.msra.mxu0 0.0
  %67 = vmatprep.subr.mxu0 0.0
  %68 = vmatpush1.msra.mxu0 0.0
  %69 = vmatprep.subr.mxu0 0.0
  %70 = vmatpush1.msra.mxu0 0.0
  %71 = vmatprep.subr.mxu0 0.0
  %72 = vmatpush1.msra.mxu0 0.0
  %73 = vmatprep.subr.mxu0 0.0
  %74 = vmatpush1.msra.mxu0 0.0
  %75 = vmatprep.subr.mxu0 0.0
  %76 = vmatpush1.msra.mxu0 0.0
  %77 = vmatprep.subr.mxu0 0.0
  %78 = vmatpush1.msra.mxu0 0.0
  %79 = vmatprep.subr.mxu0 0.0
  %80 = vmatpush1.msra.mxu0 0.0
  %81 = vmatprep.subr.mxu0 0.0
  %82 = vmatpush1.msra.mxu0 0.0
  %83 = vmatprep.subr.mxu0 0.0
  %84 = vmatpush1.msra.mxu0 0.0
  %85 = vmatprep.subr.mxu0 0.0
  %86 = vmatpush1.msra.mxu0 0.0
  %87 = vmatprep.subr.mxu0 0.0
  %88 = vmatpush1.msra.mxu0 0.0
  %89 = vmatprep.subr.mxu0 0.0
  %90 = vmatpush1.msra.mxu0 0.0
  %91 = vmatprep.subr.mxu0 0.0
  %92 = vmatpush1.msra.mxu0 0.0
  %93 = vmatprep.subr.mxu0 0.0
  %94 = vmatpush1.msra.mxu0 0.0
  %95 = vmatprep.subr.mxu0 0.0
  %96 = vmatpush1.msra.mxu0 0.0
  %97 = vmatprep.mubr.f32.mxu0 0.0
  %98 = vmatmul.mubr.f32.gmra.mrb[0].mxu0 %v27
  %v99 = vpop.f32.mrb[0].mxu0
  %v100 = vadd.f32 %v23, %v99
  %v101 = vpop.f32.mrb[0].mxu0
  %102 = vdwg.mxu0
  %103 = vst [vmem:[%s3] sm:$0xff] %v100
  // Predicated region
  $region14: #{spatial_embedding.1} parent=0 // pred_check
    _
  $region15: #{spatial_embedding.1} parent=0 // pred_check_branch
    %105 = sbr.rel (0) target = $region17
  $region16: #{spatial_embedding.1} parent=0 // pred_region
    _
  $region17: #{spatial_embedding.1} parent=0 // pred_fallthru
    _
  // Predicated region
  $region18: #{spatial_embedding.1} parent=0 // pred_check
    _
  $region19: #{spatial_embedding.1} parent=0 // pred_check_branch
    %107 = sbr.rel (0) target = $region21
  $region20: #{spatial_embedding.1} parent=0 // pred_region
    _
  $region21: #{spatial_embedding.1} parent=0 // pred_fallthru
    _

</llo_original>
